<compile_context>
chip_gen: v7x
topology: tpu7x:2x2x1
jax: 0.10.0
libtpu: 0.0.40
codegen_flags: <defaults>
</compile_context>

<pallas_src>
import jax
import jax.numpy as jnp
from jax import lax
from jax.experimental import pallas as pl
from jax.experimental.pallas import tpu as pltpu


# --------------------------- in-kernel RNG helpers --------------------------- #

def _hash_u32(x):
    """lowbias32 finalizer: strong avalanche on sequential counters (xor/shift/mul only)."""
    x = (x ^ (x >> 16)) * jnp.uint32(0x7FEB352D)
    x = (x ^ (x >> 15)) * jnp.uint32(0x846CA68B)
    return x ^ (x >> 16)


def _uniform01_from_bits(bits):
    """U[0,1) from 32 random bits via the mantissa trick (23-bit resolution), like torch.rand."""
    f = lax.bitcast_convert_type((bits >> 9) | jnp.uint32(0x3F800000), jnp.float32)
    return f - 1.0


def _ndtri(p):
    """Acklam's rational approximation of the inverse standard-normal CDF.

    Only mul/add/div/log/sqrt/select (VPU/EUP); error ~1e-4 sigma in f32 — far below the
    noise magnitudes being modeled.
    """
    a0, a1, a2, a3, a4, a5 = (-3.969683028665376e+01, 2.209460984245205e+02,
                              -2.759285104469687e+02, 1.383577518672690e+02,
                              -3.066479806614716e+01, 2.506628277459239e+00)
    b0, b1, b2, b3, b4 = (-5.447609879822406e+01, 1.615858368580409e+02,
                          -1.556989798598866e+02, 6.680131188771972e+01,
                          -1.328068155288572e+01)
    c0, c1, c2, c3, c4, c5 = (-7.784894002430293e-03, -3.223964580411365e-01,
                              -2.400758277161838e+00, -2.549732539343734e+00,
                              4.374664141464968e+00, 2.938163982698783e+00)
    d0, d1, d2, d3 = (7.784695709041462e-03, 3.224671290700398e-01,
                      2.445134137142996e+00, 3.754408661907416e+00)
    p_low = 0.02425

    # central region
    q = p - 0.5
    r = q * q
    num_c = (((((a0 * r + a1) * r + a2) * r + a3) * r + a4) * r + a5) * q
    den_c = ((((b0 * r + b1) * r + b2) * r + b3) * r + b4) * r + 1.0
    x_c = num_c / den_c

    # tails (evaluate the symmetric tail variable, negate for the upper tail)
    pt = jnp.minimum(p, 1.0 - p)
    qt = jnp.sqrt(-2.0 * jnp.log(pt))
    num_t = ((((c0 * qt + c1) * qt + c2) * qt + c3) * qt + c4) * qt + c5
    den_t = (((d0 * qt + d1) * qt + d2) * qt + d3) * qt + 1.0
    x_t = num_t / den_t
    x_t = jnp.where(p > 0.5, -x_t, x_t)

    in_tail = jnp.logical_or(p < p_low, p > 1.0 - p_low)
    return jnp.where(in_tail, x_t, x_c)


# ----------------------------- Pallas kernels ----------------------------- #

def _make_noise_kernel(R, C, n_ch, rt):
    """forward(..., add_noise=True) for one (row_tile, c) tile of one (batch, channel)."""

    def kernel(seed_ref, p_ref, x_ref, fwc_ref, row_ref, o_ref):
        i = pl.program_id(0)      # row tile (leading parallel axis — megacore sharding)
        ch = pl.program_id(1)     # channel
        b = pl.program_id(2)      # batch (innermost: fwc block reused across it)

        g = p_ref[0]
        h = p_ref[1]
        shot_s = p_ref[2]
        quant_s = p_ref[3]
        rd_var = p_ref[4]         # read^2 + dark^2 * t  (fused read + dark variance)

        x = x_ref[...]            # (rt, c)
        fwc = fwc_ref[...]        # (rt, c)

        z0 = x * g + h
        under = z0 < fwc                      # full-well mask, computed once
        z = jnp.where(under, z0, fwc)         # full-well-capacity clamp

        # Globally unique per-element counters -> salted hash -> random bits.
        base = ((b * n_ch + ch) * R + i * rt) * C              # int32 scalar
        rr = lax.broadcasted_iota(jnp.int32, x.shape, 0)
        cc = lax.broadcasted_iota(jnp.int32, x.shape, 1)
        elem = lax.bitcast_convert_type(base + rr * C + cc, jnp.uint32)
        seed_u = seed_ref[0].astype(jnp.uint32)

        bits_n = _hash_u32(elem ^ (seed_u + jnp.uint32(0x85EBCA6B)))   # Gaussian stream
        bits_q = _hash_u32(elem ^ (seed_u + jnp.uint32(0xC2B2AE35)))   # quant stream

        u_n = jnp.maximum(_uniform01_from_bits(bits_n), 5.9604645e-08)  # keep log() finite
        gauss = _ndtri(u_n)

        # Fused shot + read + dark noise: one Gaussian with summed variance.
        shot_var = (shot_s * g) * (shot_s * g) * jnp.maximum(x, 0.0)
        var = jnp.where(under, shot_var, 0.0) + rd_var
        z = z + gauss * jnp.sqrt(var)

        z = z + row_ref[...]                                   # (rt, 1): row + rowt, bcast over lanes
        z = z + (_uniform01_from_bits(bits_q) - 0.5) * quant_s
        o_ref[...] = jnp.clip(z, 0.0, 2.0 ** 12 - 1.0)

    return kernel


def _clean_kernel(p_ref, x_ref, fwc_ref, o_ref):
    """forward(..., add_noise=False) for one (row_tile, c) tile."""
    z = x_ref[...] * p_ref[0] + p_ref[1]
    fwc = fwc_ref[...]
    z = jnp.where(z < fwc, z, fwc)
    o_ref[...] = jnp.clip(z, 0.0, 2.0 ** 12 - 1.0)


# ----------------------------- tiling helpers ----------------------------- #

def _vmem_capacity_bytes():
    """Trace-time VMEM capacity query (sizes row tiles per TPU generation).

    Conservative default of 64 MiB (v7x per-TensorCore VMEM); the /24 tile target below
    stays conservative even if the reported number were per-chip on v7x.
    """
    try:
        info = pltpu.get_tpu_info()
        for name in ("vmem_capacity_bytes", "vmem_size_bytes", "vmem_bytes"):
            v = getattr(info, name, None)
            if v:
                return int(min(int(v), 128 * 1024 * 1024))
    except Exception:
        pass
    return 64 * 1024 * 1024


def _choose_row_tile(r, c, vmem_cap):
    """Row tile (multiple of 8, or full r) sized from VMEM; partial last tile via cdiv.

    ~4 double-buffered f32 streams of (rows, c) are live (x, fwc, out + PRNG/ndtri
    temporaries), so target ~vmem_cap/24 bytes per block.
    """
    target = max(512 * 1024, vmem_cap // 24)
    rows = target // max(1, c * 4)
    if rows >= r:
        return r
    return max(8, (int(rows) // 8) * 8)


# ----------------------------- module wrapper ----------------------------- #

class NoiseGeneratorPallas:
    """JAX/Pallas port of NoiseGenerator (forward pass only, module as constructed).

    The torch module initializes g/h/read/dark as constant-filled per-pixel maps and
    shot/row/rowt/quant as scalars; those constants are folded into SMEM scalars.
    """
    # TODO(synk): trained, spatially-varying g/h/read/dark maps would need to be passed
    # back in as (1, n, r, c) VMEM blocks (g/h) or folded into a per-pixel variance map.

    def __init__(self, r=16, c=128, n=1):
        self.r, self.c, self.n = r, c, n
        # Synthetic deterministic full-well-capacity map standing in for np.load('fwc.npy')
        # (file shape (r, c, n) -> transpose(2, 0, 1) -> unsqueeze(0) = (1, n, r, c)).
        ii = jnp.arange(r, dtype=jnp.float32)[:, None]
        jj = jnp.arange(c, dtype=jnp.float32)[None, :]
        fwc2d = 3200.0 + 400.0 * jnp.sin(0.1 * ii) * jnp.cos(0.05 * jj)
        self.fwc = jnp.broadcast_to(fwc2d, (1, n, r, c)).astype(jnp.float32)

        # scalar parameters (initialization values of the torch module)
        self.g = 1.0
        self.h = 0.0
        self.read = 15.0
        self.dark = 0.03
        self.shot = 0.4
        self.row = 5.0
        self.rowt = 5.0
        self.quant = 5.0

    def forward(self, x, t, add_noise, key=None):
        B, n, r, c = x.shape
        assert (n, r, c) == (self.n, self.r, self.c)

        vmem_cap = _vmem_capacity_bytes()
        rt = _choose_row_tile(r, c, vmem_cap)
        n_tiles = pl.cdiv(r, rt)
        # Row tiles lead (parallel axis to shard across v7x TensorCores);
        # batch is innermost so the batch-shared fwc block is not re-DMA'd per step.
        grid = (n_tiles, n, B)
        blk_bytes = rt * c * 4
        vmem_limit = int(min(3 * vmem_cap // 4, max(32 * 1024 * 1024, 12 * blk_bytes)))

        # Keep the block's last dim the full c (multiple of 128 for lane-dense stores
        # whenever the sensor width is; pad c in the wrapper for odd widths).
        data_spec = pl.BlockSpec((None, None, rt, c), lambda i, ch, b: (b, ch, i, 0))
        fwc_spec = pl.BlockSpec((None, None, rt, c), lambda i, ch, b: (0, ch, i, 0))
        row_spec = pl.BlockSpec((None, None, rt, 1), lambda i, ch, b: (b, ch, i, 0))
        smem_spec = pl.BlockSpec(memory_space=pltpu.MemorySpace.SMEM)
        out_shape = jax.ShapeDtypeStruct(x.shape, jnp.float32)
        cparams = pltpu.CompilerParams(
            dimension_semantics=("parallel", "parallel", "parallel"),
            vmem_limit_bytes=vmem_limit)

        t32 = jnp.asarray(t, dtype=jnp.float32)
        rd_var = jnp.float32(self.read ** 2) + jnp.float32(self.dark ** 2) * t32
        params = jnp.array([self.g, self.h, self.shot, self.quant, 0.0, 0.0, 0.0, 0.0],
                           dtype=jnp.float32).at[4].set(rd_var)

        if not add_noise:
            return pl.pallas_call(
                _clean_kernel,
                grid=grid,
                in_specs=[smem_spec, data_spec, fwc_spec],
                out_specs=data_spec,
                out_shape=out_shape,
                compiler_params=cparams,
            )(params, x, self.fwc)

        if key is None:
            raise ValueError("add_noise=True requires a PRNG key")
        k_row, k_rowt, k_seed = jax.random.split(key, 3)
        # Row noise stays host-side: it is tiny ((B,n,r,1)) and the `rowt` component must
        # be the *same* draw for every batch element; both are pre-combined into a single
        # per-row offset.
        row_off = (jax.random.normal(k_row, (B, n, r, 1), jnp.float32) * self.row
                   + jax.random.normal(k_rowt, (1, n, r, 1), jnp.float32) * self.rowt)
        seed = jax.random.randint(k_seed, (1,), 0, 2 ** 31 - 1, dtype=jnp.int32)

        elems = B * n * r * c
        cost = pl.CostEstimate(
            flops=110 * elems,                       # hash + ndtri + noise math
            transcendentals=3 * elems,               # log + 2 sqrt per element
            bytes_accessed=8 * elems + self.fwc.size * 4 + row_off.size * 4)

        kernel = _make_noise_kernel(r, c, n, rt)
        return pl.pallas_call(
            kernel,
            grid=grid,
            in_specs=[smem_spec, smem_spec, data_spec, fwc_spec, row_spec],
            out_specs=data_spec,
            out_shape=out_shape,
            compiler_params=cparams,
            cost_estimate=cost,
        )(seed, params, x, self.fwc, row_off)


if __name__ == "__main__":
    B, n, r, c = 2, 1, 16, 128
    key = jax.random.PRNGKey(0)
    kx, knoise = jax.random.split(key)
    x = jax.random.uniform(kx, (B, n, r, c), jnp.float32, 0.0, 4000.0)  # nonneg input
    t = 0.125

    gen = NoiseGeneratorPallas(r=r, c=c, n=n)

    z_clean = gen.forward(x, t, add_noise=False)
    z_noisy = gen.forward(x, t, add_noise=True, key=knoise)
    jax.block_until_ready((z_clean, z_noisy))

    # --- clean path: exact against a pure-JAX reference -------------------------------
    xg = x * gen.g + gen.h
    ref_clean = jnp.clip(jnp.where(xg < gen.fwc, xg, gen.fwc), 0.0, 4095.0)
    assert z_clean.shape == x.shape and z_clean.dtype == jnp.float32
    assert jnp.allclose(z_clean, ref_clean, atol=1e-3, rtol=1e-6)

    # --- noisy path: RNG lives in-kernel, so validate statistically -------------------
    assert z_noisy.shape == x.shape and z_noisy.dtype == jnp.float32
    assert bool(jnp.all(jnp.isfinite(z_noisy)))
    assert float(jnp.min(z_noisy)) >= 0.0 and float(jnp.max(z_noisy)) <= 4095.0

    resid = z_noisy - z_clean
    under = (xg < gen.fwc).astype(jnp.float32)
    pred_var = ((gen.shot ** 2) * x * (gen.g ** 2) * under
                + gen.read ** 2 + (gen.dark ** 2) * t
                + gen.row ** 2 + gen.rowt ** 2 + (gen.quant ** 2) / 12.0)
    pred_rms = float(jnp.sqrt(jnp.mean(pred_var)))
    rms = float(jnp.sqrt(jnp.mean(resid ** 2)))
    mean_resid = float(jnp.mean(resid))
    assert 0.8 < rms / pred_rms < 1.25, (rms, pred_rms)
    assert abs(mean_resid) < 8.0, mean_resid

    print("KERNEL_OK")
</pallas_src>

<mosaic_0001>
module attributes {stable_mosaic.version = 11 : i64} {
  func.func @_clean_kernel(%arg0: i32, %arg1: i32, %arg2: i32, %arg3: memref<8xf32, #tpu.memory_space<smem>>, %arg4: memref<1x1x16x128xf32, #tpu.memory_space<vmem>>, %arg5: memref<1x1x16x128xf32, #tpu.memory_space<vmem>>, %arg6: memref<1x1x16x128xf32, #tpu.memory_space<vmem>>) attributes {dimension_semantics = [#tpu.dimension_semantics<parallel>, #tpu.dimension_semantics<parallel>, #tpu.dimension_semantics<parallel>], iteration_bounds = array<i64: 1, 1, 2>, scalar_prefetch = 0 : i64, scratch_operands = 0 : i64, tpu.core_type = #tpu.core_type<tc>, window_params = [{transform_indices = @transform_0, window_bounds = array<i64: 8>}, {transform_indices = @transform_1, window_bounds = array<i64: 1, 1, 16, 128>}, {transform_indices = @transform_2, window_bounds = array<i64: 1, 1, 16, 128>}, {transform_indices = @transform_3, window_bounds = array<i64: 1, 1, 16, 128>}]} {
    %c0 = arith.constant 0 : index
    %c0_0 = arith.constant 0 : index
    %c0_1 = arith.constant 0 : index
    %c0_2 = arith.constant 0 : index
    %0 = vector.load %arg4[%c0, %c0_0, %c0_1, %c0_2] : memref<1x1x16x128xf32, #tpu.memory_space<vmem>>, vector<1x1x16x128xf32>
    %1 = vector.shape_cast %0 : vector<1x1x16x128xf32> to vector<16x128xf32>
    %c0_3 = arith.constant 0 : index
    %2 = memref.load %arg3[%c0_3] : memref<8xf32, #tpu.memory_space<smem>>
    %3 = vector.broadcast %2 : f32 to vector<16x128xf32>
    %4 = arith.mulf %1, %3 : vector<16x128xf32>
    %c1 = arith.constant 1 : index
    %5 = memref.load %arg3[%c1] : memref<8xf32, #tpu.memory_space<smem>>
    %6 = vector.broadcast %5 : f32 to vector<16x128xf32>
    %7 = arith.addf %4, %6 : vector<16x128xf32>
    %c0_4 = arith.constant 0 : index
    %c0_5 = arith.constant 0 : index
    %c0_6 = arith.constant 0 : index
    %c0_7 = arith.constant 0 : index
    %8 = vector.load %arg5[%c0_4, %c0_5, %c0_6, %c0_7] : memref<1x1x16x128xf32, #tpu.memory_space<vmem>>, vector<1x1x16x128xf32>
    %9 = vector.shape_cast %8 : vector<1x1x16x128xf32> to vector<16x128xf32>
    %10 = arith.cmpf olt, %7, %9 : vector<16x128xf32>
    %11 = arith.select %10, %7, %9 : vector<16x128xi1>, vector<16x128xf32>
    %cst = arith.constant 0.000000e+00 : f32
    %cst_8 = arith.constant 4.095000e+03 : f32
    %12 = vector.broadcast %cst : f32 to vector<16x128xf32>
    %13 = arith.maximumf %12, %11 : vector<16x128xf32>
    %14 = vector.broadcast %cst_8 : f32 to vector<16x128xf32>
    %15 = arith.minimumf %14, %13 : vector<16x128xf32>
    %c0_9 = arith.constant 0 : index
    %c0_10 = arith.constant 0 : index
    %c0_11 = arith.constant 0 : index
    %c0_12 = arith.constant 0 : index
    %16 = vector.load %arg6[%c0_9, %c0_10, %c0_11, %c0_12] : memref<1x1x16x128xf32, #tpu.memory_space<vmem>>, vector<1x1x16x128xf32>
    %17 = vector.shape_cast %16 : vector<1x1x16x128xf32> to vector<16x128xf32>
    %18 = vector.shape_cast %15 : vector<16x128xf32> to vector<1x1x16x128xf32>
    tpu.vector_store %arg6[%c0_9, %c0_10, %c0_11, %c0_12], %18 {strides = array<i32>} : memref<1x1x16x128xf32, #tpu.memory_space<vmem>>, vector<1x1x16x128xf32>,
    return
  }
  func.func @transform_0(%arg0: i32, %arg1: i32, %arg2: i32) -> i32 {
    %c0_i32 = arith.constant 0 : i32
    %c0_i32_0 = arith.constant 0 : i32
    return %c0_i32 : i32
  }
  func.func @transform_1(%arg0: i32, %arg1: i32, %arg2: i32) -> (i32, i32, i32, i32) {
    %c0_i32 = arith.constant 0 : i32
    %c0_i32_0 = arith.constant 0 : i32
    return %arg2, %arg1, %arg0, %c0_i32 : i32, i32, i32, i32
  }
  func.func @transform_2(%arg0: i32, %arg1: i32, %arg2: i32) -> (i32, i32, i32, i32) {
    %c0_i32 = arith.constant 0 : i32
    %c0_i32_0 = arith.constant 0 : i32
    %c0_i32_1 = arith.constant 0 : i32
    return %c0_i32, %arg1, %arg0, %c0_i32_0 : i32, i32, i32, i32
  }
  func.func @transform_3(%arg0: i32, %arg1: i32, %arg2: i32) -> (i32, i32, i32, i32) {
    %c0_i32 = arith.constant 0 : i32
    %c0_i32_0 = arith.constant 0 : i32
    return %arg2, %arg1, %arg0, %c0_i32 : i32, i32, i32, i32
  }
}

</mosaic_0001>

<llo_original>
// kernel: tpu_custom_call.1
$region0: #{tpu_custom_call.1}
  #allocation0 [shape = 'u32[]', space=smem, size = 0x4, offset = 0x4, fixed_abs, tag = 'smem constant byte address 0x4 - core index']
  #allocation1 [shape = 'u32[144,128]{1,0:T(1,128)}', space=vmem, size = 0x12000, scoped, tag = 'internal scratch']
  %s0 = inlined_call_operand.hbm [shape: f32[8], index: 0, kind: input, shape index: {}]
  %s1 = inlined_call_operand.hbm [shape: f32[2,1,16,128], index: 1, kind: input, shape index: {}]
  %s2 = inlined_call_operand.hbm [shape: f32[1,1,16,128], index: 2, kind: input, shape index: {}]
  %s3 = inlined_call_operand.hbm [shape: f32[2,1,16,128], index: 3, kind: output, shape index: {}]
  %s4 = sld [smem:[#allocation0]]
  $region57: #{tpu_custom_call.1} parent=0
    _
  %s6 = ssub.s32 1, %s4
  %s7 = scalar_select 0, %s6, %s4
  $region1: #{tpu_custom_call.1} parent=0
    #allocation2 [shape = 'u8[512]{0}', space=smem, size = 0x200, scoped, tag = 'input window, operand 0, single buffered']
    #allocation3 [shape = 's32[2]{0}', space=sflag, size = 0x8, scoped, tag = 'scoped memory for tpu_custom_call.1']
    #allocation4 [shape = 's32[2]{0}', space=sflag, size = 0x8, scoped, tag = 'scoped memory for tpu_custom_call.1']
    #allocation5 [shape = 's32[2]{0}', space=sflag, size = 0x8, scoped, tag = 'scoped memory for tpu_custom_call.1']
    #allocation6 [shape = 'u8[16384]{0}', space=vmem, size = 0x4000, scoped, tag = 'input window, operand 1']
    #allocation7 [shape = 'u8[8192]{0}', space=vmem, size = 0x2000, scoped, tag = 'input window, operand 2, single buffered']
    #allocation8 [shape = 's32[1]{0}', space=sflag, size = 0x4, scoped, tag = 'scoped memory for tpu_custom_call.1']
    #allocation9 [shape = 'u8[16384]{0}', space=vmem, size = 0x4000, scoped, tag = 'output window, operand 0']
    %8 = vsyncpa [#allocation5], 0
    %9 = vsyncpa [#allocation3], 0
    %s10 = scalar_lea.sflag [#allocation3], 1
    %11 = vsyncpa %s10, 0
    %12 = vsyncpa [#allocation8], 0
    %13 = vsyncpa [#allocation4], 0
    %s14 = scalar_lea.sflag [#allocation4], 1
    %15 = vsyncpa %s14, 0
    loop: start=0, step=1, limit=4
    $region2: #{tpu_custom_call.1} parent=1 // loop_pre_header
      _
    $region3: #{tpu_custom_call.1} parent=1 // loop_header
      %s17 = sphi 0, %s21
      %p18 = scmp.ge.s32.totalorder %s17, 4
      %s24 = sphi 0, %s43
      %s25 = sphi 0, %s39
      %s26 = sphi 0, %s35
      %s27 = sphi 0, %s24
      %s28 = sphi 0, %s25
      %s29 = sphi 0, %s26
      %s30 = sphi 0, %s27
      %s31 = sphi 0, %s28
      %s32 = sphi 0, %s29
      %s44 = sphi 0, %s44
      %s46 = sphi 0, %s44
      %s47 = sphi 0, %s46
      %s61 = sphi 0, %s47
      %s71 = sphi 0, %s73
      %s74 = sphi 0, %s71
      %s75 = sphi 0, %s74
      %s91 = sphi 0, %s75
      %s99 = sphi 0, %s101
      %s102 = sphi 0, %s99
      %s103 = sphi 0, %s102
      %s119 = sphi 0, %s103
      %s129 = sphi 0, %s131
      %s132 = sphi 0, %s129
      %s133 = sphi 0, %s132
      %s149 = sphi 0, %s133
    $region4: #{tpu_custom_call.1} parent=1 // loop_header_branch
      %20 = sbr.rel (%p18) target = $region8
    $region5: #{tpu_custom_call.1} parent=1 // loop_body
      %s22 = ssub.s32 %s17, 1
      %s23 = ssub.s32 %s17, 2
      %s33 = sadd.s32 1, %s26
      %p34 = scmp.ge.s32.totalorder %s33, 2
      %s35 = scalar_select %p34, 0, %s33
      %s36 = sadd.s32 1, %s25
      %s37 = scalar_select %p34, %s36, %s25
      %p38 = scmp.ge.s32.totalorder %s37, 1
      %s39 = scalar_select %p38, 0, %s37
      %s40 = sadd.s32 1, %s24
      %s41 = scalar_select %p38, %s40, %s24
      %p42 = scmp.ge.s32.totalorder %s41, 1
      %s43 = scalar_select %p42, 0, %s41
      %s45 = sadd.s32 %s44, 1
      %p48 = scmp.eq.s32.totalorder %s17, 1
      %p49 = scmp.ne.s32.totalorder %s44, %s46
      %p50 = scmp.eq.s32.totalorder %s17, 0
      %p51 = por %p49, %p50
      %p52 = scmp.ne.s32.totalorder %s44, %s46
      %p53 = scmp.eq.s32.totalorder %s22, 1
      %p54 = por %p52, %p53
      %p55 = scmp.ne.s32.totalorder %s46, %s47
      %p56 = scmp.eq.s32.totalorder %s22, 0
      %p57 = por %p55, %p56
      %p58 = scmp.ne.s32.totalorder %s46, %s47
      %p59 = scmp.eq.s32.totalorder %s23, 1
      %p60 = por %p58, %p59
      %p62 = scmp.ne.s32.totalorder %s47, %s61
      %p63 = scmp.eq.s32.totalorder %s23, 0
      %p64 = por %p62, %p63
      %s65 = ssub.s32 %s26, %s35
      %s66 = ssub.s32 %s25, %s39
      %s67 = sor.u32 %s65, %s66
      %s68 = ssub.s32 %s24, %s43
      %s69 = sor.u32 %s67, %s68
      %p70 = scmp.eq.s32.totalorder %s69, 0
      %s72 = sadd.s32 %s71, 1
      %s73 = scalar_select %p70, %s71, %s72
      %p76 = pneg %p70
      %p77 = scmp.eq.s32.totalorder %s17, 1
      %p78 = por %p76, %p77
      %p79 = scmp.ne.s32.totalorder %s71, %s74
      %p80 = scmp.eq.s32.totalorder %s17, 0
      %p81 = por %p79, %p80
      %p82 = scmp.ne.s32.totalorder %s71, %s74
      %p83 = scmp.eq.s32.totalorder %s22, 1
      %p84 = por %p82, %p83
      %p85 = scmp.ne.s32.totalorder %s74, %s75
      %p86 = scmp.eq.s32.totalorder %s22, 0
      %p87 = por %p85, %p86
      %p88 = scmp.ne.s32.totalorder %s74, %s75
      %p89 = scmp.eq.s32.totalorder %s23, 1
      %p90 = por %p88, %p89
      %p92 = scmp.ne.s32.totalorder %s75, %s91
      %p93 = scmp.eq.s32.totalorder %s23, 0
      %p94 = por %p92, %p93
      %s95 = ssub.s32 %s25, %s39
      %s96 = ssub.s32 %s24, %s43
      %s97 = sor.u32 %s95, %s96
      %p98 = scmp.eq.s32.totalorder %s97, 0
      %s100 = sadd.s32 %s99, 1
      %s101 = scalar_select %p98, %s99, %s100
      %p104 = pneg %p98
      %p105 = scmp.eq.s32.totalorder %s17, 1
      %p106 = por %p104, %p105
      %p107 = scmp.ne.s32.totalorder %s99, %s102
      %p108 = scmp.eq.s32.totalorder %s17, 0
      %p109 = por %p107, %p108
      %p110 = scmp.ne.s32.totalorder %s99, %s102
      %p111 = scmp.eq.s32.totalorder %s22, 1
      %p112 = por %p110, %p111
      %p113 = scmp.ne.s32.totalorder %s102, %s103
      %p114 = scmp.eq.s32.totalorder %s22, 0
      %p115 = por %p113, %p114
      %p116 = scmp.ne.s32.totalorder %s102, %s103
      %p117 = scmp.eq.s32.totalorder %s23, 1
      %p118 = por %p116, %p117
      %p120 = scmp.ne.s32.totalorder %s103, %s119
      %p121 = scmp.eq.s32.totalorder %s23, 0
      %p122 = por %p120, %p121
      %s123 = ssub.s32 %s26, %s35
      %s124 = ssub.s32 %s25, %s39
      %s125 = sor.u32 %s123, %s124
      %s126 = ssub.s32 %s24, %s43
      %s127 = sor.u32 %s125, %s126
      %p128 = scmp.eq.s32.totalorder %s127, 0
      %s130 = sadd.s32 %s129, 1
      %s131 = scalar_select %p128, %s129, %s130
      %p134 = pneg %p128
      %p135 = scmp.eq.s32.totalorder %s17, 1
      %p136 = por %p134, %p135
      %p137 = scmp.ne.s32.totalorder %s129, %s132
      %p138 = scmp.eq.s32.totalorder %s17, 0
      %p139 = por %p137, %p138
      %p140 = scmp.ne.s32.totalorder %s129, %s132
      %p141 = scmp.eq.s32.totalorder %s22, 1
      %p142 = por %p140, %p141
      %p143 = scmp.ne.s32.totalorder %s132, %s133
      %p144 = scmp.eq.s32.totalorder %s22, 0
      %p145 = por %p143, %p144
      %p146 = scmp.ne.s32.totalorder %s132, %s133
      %p147 = scmp.eq.s32.totalorder %s23, 1
      %p148 = por %p146, %p147
      %p150 = scmp.ne.s32.totalorder %s133, %s149
      %p151 = scmp.eq.s32.totalorder %s23, 0
      %p152 = por %p150, %p151
      %p153 = scmp.le.s32.totalorder 1, %s17
      %p154 = scmp.lt.s32.totalorder %s17, 3
      %p155 = pnand %p153, %p154
      %p156 = pneg %p155
      // Predicated region
      $region9: #{tpu_custom_call.1} parent=5 // pred_check
        _
      $region10: #{tpu_custom_call.1} parent=5 // pred_check_branch
        %158 = sbr.rel (%p155) target = $region12
      $region11: #{tpu_custom_call.1} parent=5 // pred_region
        %s159 = ssub.s32 %s17, 1
        // Predicated region
        $region13: #{tpu_custom_call.1} parent=11 // pred_check
          %p160 = pneg %p57
        $region14: #{tpu_custom_call.1} parent=11 // pred_check_branch
          %162 = sbr.rel (%p160) target = $region16
        $region15: #{tpu_custom_call.1} parent=11 // pred_region
          %s164 = ssub.s32 16, 16
          %165 = vsyncadd [#allocation5], %s164
          %168 = dma.hbm_to_smem %s0, 16, [#allocation2], [#allocation5]
        $region16: #{tpu_custom_call.1} parent=11 // pred_fallthru
          _
        // Predicated region
        $region17: #{tpu_custom_call.1} parent=11 // pred_check
          %p169 = pneg %p115
        $region18: #{tpu_custom_call.1} parent=11 // pred_check_branch
          %171 = sbr.rel (%p169) target = $region20
        $region19: #{tpu_custom_call.1} parent=11 // pred_region
          %s172 = smul.u32 2, %s27
          %s174 = ssub.s32 256, 256
          %175 = vsyncadd [#allocation8], %s174
          %s176 = smul.addr %s28, 2
          %s177 = sadd.s32 %s172, %s176
          %s178 = smul.addr %s177, 128
          %s179 = scalar_lea.hbm %s2, %s178
          %s180 = sshll.u32 [#allocation7], 4
          %s181 = int_to_ptr.vmem [resolvable:$true] %s180
          %186 = dma.hbm_to_vmem [thread:$0]  %s179, 256, %s181, [#allocation8], 128, 128, 8
        $region20: #{tpu_custom_call.1} parent=11 // pred_fallthru
          _
      $region12: #{tpu_custom_call.1} parent=5 // pred_fallthru
        _
      %p187 = scmp.lt.s32.totalorder %s17, 2
      // Predicated region
      $region21: #{tpu_custom_call.1} parent=5 // pred_check
        %p188 = pneg %p187
      $region22: #{tpu_custom_call.1} parent=5 // pred_check_branch
        %190 = sbr.rel (%p188) target = $region24
      $region23: #{tpu_custom_call.1} parent=5 // pred_region
        // Predicated region
        $region25: #{tpu_custom_call.1} parent=23 // pred_check
          %p191 = pneg %p81
        $region26: #{tpu_custom_call.1} parent=23 // pred_check_branch
          %193 = sbr.rel (%p191) target = $region28
        $region27: #{tpu_custom_call.1} parent=23 // pred_region
          %s194 = sand.u32 %s71, 1
          %s195 = scalar_lea.sflag [#allocation3], %s194
          %s196 = sand.u32 %s71, 1
          %s197 = smul.addr %s196, 16
          %s198 = scalar_lea.vmem [#allocation6], %s197
          %s199 = smul.u32 2, %s24
          %s201 = ssub.s32 256, 256
          %202 = vsyncadd %s195, %s201
          %s203 = smul.addr %s25, 2
          %s204 = sadd.s32 %s199, %s203
          %s205 = smul.addr %s26, 2
          %s206 = sadd.s32 %s204, %s205
          %s207 = smul.addr %s206, 128
          %s208 = scalar_lea.hbm %s1, %s207
          %s209 = sshll.u32 %s198, 4
          %s210 = int_to_ptr.vmem [resolvable:$true] %s209
          %215 = dma.hbm_to_vmem [thread:$0]  %s208, 256, %s210, %s195, 128, 128, 8
        $region28: #{tpu_custom_call.1} parent=23 // pred_fallthru
          _
      $region24: #{tpu_custom_call.1} parent=5 // pred_fallthru
        _
      %p216 = scmp.le.s32.totalorder 1, %s17
      %p217 = scmp.lt.s32.totalorder %s17, 3
      %p218 = pnand %p216, %p217
      %p219 = pneg %p218
      // Predicated region
      $region29: #{tpu_custom_call.1} parent=5 // pred_check
        _
      $region30: #{tpu_custom_call.1} parent=5 // pred_check_branch
        %221 = sbr.rel (%p218) target = $region32
      $region31: #{tpu_custom_call.1} parent=5 // pred_region
        %s222 = ssub.s32 %s17, 1
        // Predicated region
        $region33: #{tpu_custom_call.1} parent=31 // pred_check
          %p223 = pneg %p57
        $region34: #{tpu_custom_call.1} parent=31 // pred_check_branch
          %225 = sbr.rel (%p223) target = $region36
        $region35: #{tpu_custom_call.1} parent=31 // pred_region
          %226 = dma.done [#allocation5], 16
        $region36: #{tpu_custom_call.1} parent=31 // pred_fallthru
          _
        %s227 = sand.u32 %s74, 1
        %s228 = scalar_lea.sflag [#allocation3], %s227
        %s229 = sand.u32 %s74, 1
        %s230 = smul.addr %s229, 16
        %s231 = scalar_lea.vmem [#allocation6], %s230
        // Predicated region
        $region37: #{tpu_custom_call.1} parent=31 // pred_check
          %p232 = pneg %p87
        $region38: #{tpu_custom_call.1} parent=31 // pred_check_branch
          %234 = sbr.rel (%p232) target = $region40
        $region39: #{tpu_custom_call.1} parent=31 // pred_region
          %235 = dma.done %s228, 256
        $region40: #{tpu_custom_call.1} parent=31 // pred_fallthru
          _
        // Predicated region
        $region41: #{tpu_custom_call.1} parent=31 // pred_check
          %p236 = pneg %p115
        $region42: #{tpu_custom_call.1} parent=31 // pred_check_branch
          %238 = sbr.rel (%p236) target = $region44
        $region43: #{tpu_custom_call.1} parent=31 // pred_region
          %239 = dma.done [#allocation8], 256
        $region44: #{tpu_custom_call.1} parent=31 // pred_fallthru
          _
        %240 = sfence
        %p241 = pneg %p57
        %p242 = pneg %p54
        %s243 = sand.u32 %s74, 1
        %s244 = scalar_lea.sflag [#allocation3], %s243
        %s245 = sand.u32 %s74, 1
        %s246 = smul.addr %s245, 16
        %s247 = scalar_lea.vmem [#allocation6], %s246
        %p248 = pneg %p87
        %p249 = pneg %p84
        %p250 = pneg %p115
        %p251 = pneg %p112
        %p252 = pneg %p145
        %p253 = pneg %p142
        %s254 = sand.u32 %s132, 1
        %s255 = scalar_lea.sflag [#allocation4], %s254
        %s256 = sand.u32 %s132, 1
        %s257 = smul.addr %s256, 16
        %s258 = scalar_lea.vmem [#allocation9], %s257
        %s259 = smul.u32 2, %s27
        %s260 = smul.u32 2, %s27
        %s261 = smul.u32 2, %s27
        %v262 = vld [vmem:[%s231] sm:$0xff]
        %v263 = vld [vmem:[%s231 + $0x8] sm:$0xff]
        %s264 = sld [smem:[#allocation2]]
        %v265 = vstv %s264
        %v266 = vmul.f32 %v262, %v265
        %v267 = vmul.f32 %v263, %v265
        %s268 = sld [smem:[#allocation2 + $0x1]]
        %v269 = vstv %s268
        %v270 = vadd.f32 %v266, %v269
        %v271 = vadd.f32 %v267, %v269
        %v272 = vld [vmem:[#allocation7] sm:$0xff]
        %v273 = vld [vmem:[#allocation7 + $0x8] sm:$0xff]
        %vm274 = vcmp.lt.f32.partialorder %v270, %v272
        %vm275 = vcmp.lt.f32.partialorder %v271, %v273
        %v276 = vsel %vm274, %v270, %v272
        %v277 = vsel %vm275, %v271, %v273
        %v278 = vmax.f32 %v276, 0.0
        %v279 = vmax.f32 %v277, 0.0
        %v280 = vmin.f32 %v278, 4095.0
        %v281 = vmin.f32 %v279, 4095.0
        %282 = vst [vmem:[%s258] sm:$0xff] %v280
        %283 = vst [vmem:[%s258 + $0x8] sm:$0xff] %v281
        %s284 = sand.u32 %s132, 1
        %s285 = scalar_lea.sflag [#allocation4], %s284
        %s286 = sand.u32 %s132, 1
        %s287 = smul.addr %s286, 16
        %s288 = scalar_lea.vmem [#allocation9], %s287
        // Predicated region
        $region45: #{tpu_custom_call.1} parent=31 // pred_check
          %p289 = pneg %p142
        $region46: #{tpu_custom_call.1} parent=31 // pred_check_branch
          %291 = sbr.rel (%p289) target = $region48
        $region47: #{tpu_custom_call.1} parent=31 // pred_region
          %s292 = smul.u32 2, %s27
          %s294 = ssub.s32 256, 256
          %295 = vsyncadd %s285, %s294
          %s296 = smul.addr %s28, 2
          %s297 = sadd.s32 %s292, %s296
          %s298 = smul.addr %s29, 2
          %s299 = sadd.s32 %s297, %s298
          %s300 = smul.addr %s299, 128
          %s301 = scalar_lea.hbm %s3, %s300
          %s302 = sshll.u32 %s288, 4
          %s303 = int_to_ptr.vmem [resolvable:$true] %s302
          %308 = dma.vmem_to_hbm [thread:$0]  %s303, 256, %s301, %s285, 128, 128, 8
        $region48: #{tpu_custom_call.1} parent=31 // pred_fallthru
          _
      $region32: #{tpu_custom_call.1} parent=5 // pred_fallthru
        _
      %p309 = scmp.le.s32.totalorder 2, %s17
      // Predicated region
      $region49: #{tpu_custom_call.1} parent=5 // pred_check
        %p310 = pneg %p309
      $region50: #{tpu_custom_call.1} parent=5 // pred_check_branch
        %312 = sbr.rel (%p310) target = $region52
      $region51: #{tpu_custom_call.1} parent=5 // pred_region
        %s313 = ssub.s32 %s17, 2
        // Predicated region
        $region53: #{tpu_custom_call.1} parent=51 // pred_check
          %p314 = pneg %p148
        $region54: #{tpu_custom_call.1} parent=51 // pred_check_branch
          %316 = sbr.rel (%p314) target = $region56
        $region55: #{tpu_custom_call.1} parent=51 // pred_region
          %s317 = sand.u32 %s133, 1
          %s318 = scalar_lea.sflag [#allocation4], %s317
          %s319 = sand.u32 %s133, 1
          %s320 = smul.addr %s319, 16
          %s321 = scalar_lea.vmem [#allocation9], %s320
          %322 = dma.done %s318, 256
        $region56: #{tpu_custom_call.1} parent=51 // pred_fallthru
          _
      $region52: #{tpu_custom_call.1} parent=5 // pred_fallthru
        _
    $region6: #{tpu_custom_call.1} parent=1 // loop_footer
      %s21 = sadd.s32 1, %s17
    $region7: #{tpu_custom_call.1} parent=1 // loop_footer_branch
      %16 = sbr.rel target = $region3
    $region8: #{tpu_custom_call.1} parent=1 // loop_exit
      _
    %323 = vsyncpa [#allocation3], 1
    %s324 = scalar_lea.sflag [#allocation3], 1
    %325 = vsyncpa %s324, 1
    %326 = vsyncpa [#allocation8], 1
    %327 = vsyncpa [#allocation4], 1
    %s328 = scalar_lea.sflag [#allocation4], 1
    %329 = vsyncpa %s328, 1
    %330 = vsyncpa [#allocation5], 1
    %s331 = scalar_lea.sflag [#allocation5], 1
    %332 = vsyncpa %s331, 1

</llo_original>
